<compile_context>
chip_gen: v6e
topology: v6e:2x2x1
jax: 0.10.0
libtpu: 0.0.40
codegen_flags: <defaults>
</compile_context>

<pallas_src>
import math

import jax
import jax.numpy as jnp
from jax.experimental import pallas as pl
from jax.experimental.pallas import tpu as pltpu


def _state_gen_kernel(state_ref, out_ref):
    # state_ref: (1, 1, E)  -- one layer's state row, resident across batch tiles
    # out_ref:   (1, TB, E) -- current batch tile of the output for that layer
    # Sublane broadcast only; compute is fully hidden under the output HBM DMA.
    out_ref[...] = jnp.broadcast_to(state_ref[...], out_ref.shape)


def _pick_block_rows(batch: int, embed: int, itemsize: int, max_block_rows=None) -> int:
    """Rows per output tile: target ~4 MiB blocks, sublane-aligned."""
    sub = max(8, 32 // itemsize)                      # 8 (f32), 16 (bf16), 32 (int8)
    target = (4 * 1024 * 1024) // max(1, embed * itemsize)
    if max_block_rows is not None:                    # test/override knob
        target = min(target, max_block_rows)
    target = max(sub, (target // sub) * sub)
    if batch <= target:
        return batch                                  # single tile == full dim (always legal)
    return target


def _broadcast_rows(row: jax.Array, batch: int, max_block_rows=None) -> jax.Array:
    """row: (layers, 1, E) -> (layers, batch, E) via a batch-tiled Pallas broadcast."""
    layers, one, embed = row.shape
    assert one == 1
    itemsize = jnp.dtype(row.dtype).itemsize
    tb = _pick_block_rows(batch, embed, itemsize, max_block_rows)
    nb = pl.cdiv(batch, tb)                           # partial last tile: OOB writes masked

    return pl.pallas_call(
        _state_gen_kernel,
        out_shape=jax.ShapeDtypeStruct((layers, batch, embed), row.dtype),
        grid_spec=pltpu.PrefetchScalarGridSpec(
            num_scalar_prefetch=0,
            grid=(layers, nb),
            in_specs=[
                # Same block index across the batch-tile axis => the per-layer
                # state stays resident in VMEM (one tiny input DMA per layer).
                pl.BlockSpec((1, 1, embed), lambda l, b: (l, 0, 0)),
            ],
            out_specs=pl.BlockSpec((1, tb, embed), lambda l, b: (l, b, 0)),
        ),
        compiler_params=pltpu.CompilerParams(
            # Both axes independent: on v7x the two TensorCores split the tiles;
            # on v5e/v6e (1 TC) this is a harmless no-op.
            dimension_semantics=("parallel", "parallel"),
        ),
    )(row)


def gru_state_gen(state: jax.Array, batch: int, *, max_block_rows=None):
    """Pallas equivalent of GRUStateGen.forward(batch): state.repeat(1, batch, 1).

    state: (layers, 1, embed) -> returns a 1-tuple with (layers, batch, embed).
    """
    layers, one, embed = state.shape
    assert one == 1

    # Lane-dense store path: fold k batch rows into the lane dim so the block's
    # last dim is a multiple of 128 (unmasked vst). Fold/unfold reshapes are
    # contiguous row-major, i.e. free at the XLA level; the pre-tiled row is
    # only layers * lcm(embed,128) * itemsize bytes.
    k = 128 // math.gcd(embed, 128)
    if embed % 128 != 0 and k > 1 and batch % k == 0:
        row = jnp.tile(state, (1, 1, k))              # (layers, 1, k*embed) -- tiny
        out = _broadcast_rows(row, batch // k, max_block_rows=max_block_rows)
        return (out.reshape(layers, batch, embed),)

    # Natural layout path (embed already a multiple of 128, or batch not
    # foldable). Block last dim equals the full embed dim -> always legal.
    out = _broadcast_rows(state, batch, max_block_rows=max_block_rows)
    return (out,)


if __name__ == "__main__":
    # Case 1: the module's small test shape (batch % 4 != 0 -> no lane fold).
    layers, embed, batch = 1, 32, 2
    state = jax.random.uniform(jax.random.PRNGKey(0), (layers, 1, embed), dtype=jnp.float32)
    (out,) = gru_state_gen(state, batch)
    out = jax.block_until_ready(out)
    ref = jnp.tile(state, (1, batch, 1))
    assert out.shape == (layers, batch, embed), out.shape
    assert bool(jnp.array_equal(out, ref)), "mismatch vs reference broadcast (case 1)"

    # Case 2: exercises lane-dense fold (k=4 -> 128 lanes), multi-layer state
    # residency, batch tiling (forced small tiles) and a partial last tile.
    layers2, embed2, batch2 = 2, 32, 80
    state2 = jax.random.uniform(jax.random.PRNGKey(0), (layers2, 1, embed2), dtype=jnp.float32)
    (out2,) = gru_state_gen(state2, batch2, max_block_rows=8)
    out2 = jax.block_until_ready(out2)
    ref2 = jnp.tile(state2, (1, batch2, 1))
    assert out2.shape == (layers2, batch2, embed2), out2.shape
    assert bool(jnp.array_equal(out2, ref2)), "mismatch vs reference broadcast (case 2)"

    print("KERNEL_OK")
</pallas_src>

<mosaic_0001>
module attributes {stable_mosaic.version = 11 : i64} {
  func.func @_state_gen_kernel(%arg0: i32, %arg1: i32, %arg2: memref<1x1x32xf32, #tpu.memory_space<vmem>>, %arg3: memref<1x2x32xf32, #tpu.memory_space<vmem>>) attributes {dimension_semantics = [#tpu.dimension_semantics<parallel>, #tpu.dimension_semantics<parallel>], iteration_bounds = array<i64: 1, 1>, scalar_prefetch = 0 : i64, scratch_operands = 0 : i64, tpu.core_type = #tpu.core_type<tc>, window_params = [{transform_indices = @transform_0, window_bounds = array<i64: 1, 1, 32>}, {transform_indices = @transform_1, window_bounds = array<i64: 1, 2, 32>}]} {
    %c0 = arith.constant 0 : index
    %c0_0 = arith.constant 0 : index
    %c0_1 = arith.constant 0 : index
    %0 = vector.load %arg2[%c0, %c0_0, %c0_1] : memref<1x1x32xf32, #tpu.memory_space<vmem>>, vector<1x1x32xf32>
    %1 = vector.shape_cast %0 : vector<1x1x32xf32> to vector<1x1x32xf32>
    %2 = vector.broadcast %1 : vector<1x1x32xf32> to vector<1x2x32xf32>
    %c0_2 = arith.constant 0 : index
    %c0_3 = arith.constant 0 : index
    %c0_4 = arith.constant 0 : index
    %3 = vector.load %arg3[%c0_2, %c0_3, %c0_4] : memref<1x2x32xf32, #tpu.memory_space<vmem>>, vector<1x2x32xf32>
    tpu.vector_store %arg3[%c0_2, %c0_3, %c0_4], %2 {strides = array<i32>} : memref<1x2x32xf32, #tpu.memory_space<vmem>>, vector<1x2x32xf32>,
    return
  }
  func.func @transform_0(%arg0: i32, %arg1: i32) -> (i32, i32, i32) {
    %c0_i32 = arith.constant 0 : i32
    %c0_i32_0 = arith.constant 0 : i32
    %c0_i32_1 = arith.constant 0 : i32
    return %arg0, %c0_i32, %c0_i32_0 : i32, i32, i32
  }
  func.func @transform_1(%arg0: i32, %arg1: i32) -> (i32, i32, i32) {
    %c0_i32 = arith.constant 0 : i32
    %c0_i32_0 = arith.constant 0 : i32
    return %arg0, %arg1, %c0_i32 : i32, i32, i32
  }
}

</mosaic_0001>

<llo_original>
// kernel: tpu_custom_call.1
$region0: #{tpu_custom_call.1}
  #allocation0 [shape = 'u32[]', space=smem, size = 0x4, offset = 0x4, fixed_abs, tag = 'smem constant byte address 0x4 - core index']
  #allocation1 [shape = 'u32[144,128]{1,0:T(1,128)}', space=vmem, size = 0x12000, scoped, tag = 'internal scratch']
  %s0 = inlined_call_operand.hbm [shape: f32[1,1,32], index: 0, kind: input, shape index: {}]
  %s1 = inlined_call_operand.hbm [shape: f32[1,2,32], index: 1, kind: output, shape index: {}]
  %s2 = sld [smem:[#allocation0]]
  $region18: #{tpu_custom_call.1} parent=0
    _
  %s4 = ssub.s32 1, %s2
  %s5 = scalar_select 0, %s4, %s2
  $region1: #{tpu_custom_call.1} parent=0
    #allocation2 [shape = 'u8[512]{0}', space=vmem, size = 0x400, scoped, tag = 'input window, operand 0, single buffered']
    #allocation3 [shape = 's32[1]{0}', space=sflag, size = 0x4, scoped, tag = 'scoped memory for tpu_custom_call.1']
    #allocation4 [shape = 's32[1]{0}', space=sflag, size = 0x4, scoped, tag = 'scoped memory for tpu_custom_call.1']
    #allocation5 [shape = 'u8[1024]{0}', space=vmem, size = 0x400, scoped, tag = 'output window, operand 0, single buffered']
    %6 = vsyncpa [#allocation3], 0
    %7 = vsyncpa [#allocation4], 0
    // Predicated region
    $region2: #{tpu_custom_call.1} parent=1 // pred_check
      _
    $region3: #{tpu_custom_call.1} parent=1 // pred_check_branch
      %9 = sbr.rel (0) target = $region5
    $region4: #{tpu_custom_call.1} parent=1 // pred_region
      %s11 = ssub.s32 16, 16
      %12 = vsyncadd [#allocation3], %s11
      %s14 = sshll.u32 [#allocation2], 4
      %s15 = int_to_ptr.vmem [resolvable:$true] %s14
      %17 = dma.hbm_to_vmem [thread:$0]  %s0, 16, %s15, [#allocation3]
    $region5: #{tpu_custom_call.1} parent=1 // pred_fallthru
      _
    // Predicated region
    $region6: #{tpu_custom_call.1} parent=1 // pred_check
      _
    $region7: #{tpu_custom_call.1} parent=1 // pred_check_branch
      %19 = sbr.rel (0) target = $region9
    $region8: #{tpu_custom_call.1} parent=1 // pred_region
      %20 = dma.done [#allocation3], 16
    $region9: #{tpu_custom_call.1} parent=1 // pred_fallthru
      _
    %v21 = vld [vmem:[#allocation2] sm:$0x1]
    %v23 = vlaneseq
    %v24 = vshrl.u32 %v23, 7
    %v25 = vsub.s32 0, %v24
    %v26 = vrot.slane %v21, %v25
    %vm28 = vcmask 254976
    %29 = vst.msk [vmem:[#allocation5] sm:$0x3] %vm28, %v26
    // Predicated region
    $region10: #{tpu_custom_call.1} parent=1 // pred_check
      _
    $region11: #{tpu_custom_call.1} parent=1 // pred_check_branch
      %31 = sbr.rel (0) target = $region13
    $region12: #{tpu_custom_call.1} parent=1 // pred_region
      %s33 = ssub.s32 32, 32
      %34 = vsyncadd [#allocation4], %s33
      %s36 = sshll.u32 [#allocation5], 4
      %s37 = int_to_ptr.vmem [resolvable:$true] %s36
      %39 = dma.vmem_to_hbm [thread:$0]  %s37, 32, %s1, [#allocation4]
    $region13: #{tpu_custom_call.1} parent=1 // pred_fallthru
      _
    // Predicated region
    $region14: #{tpu_custom_call.1} parent=1 // pred_check
      _
    $region15: #{tpu_custom_call.1} parent=1 // pred_check_branch
      %41 = sbr.rel (0) target = $region17
    $region16: #{tpu_custom_call.1} parent=1 // pred_region
      %42 = dma.done [#allocation4], 32
    $region17: #{tpu_custom_call.1} parent=1 // pred_fallthru
      _
    %43 = vsyncpa [#allocation3], 1
    %44 = vsyncpa [#allocation4], 1

</llo_original>
